<compile_context>
chip_gen: v7x
topology: tpu7x:2x2x1
jax: 0.10.0
libtpu: 0.0.40
codegen_flags: <defaults>
</compile_context>

<pallas_src>
import jax
import jax.numpy as jnp
from jax.experimental import pallas as pl
from jax.experimental.pallas import tpu as pltpu

_LANE = 128       # vreg lane width
_SUBLANE = 8      # f32 sublane height
_MAX_TILE_B = 1024


def _round_up(n, m):
    return ((n + m - 1) // m) * m


def _pick_tile_b(B):
    """Batch tile: one step for small B; for large B an even number (>=2) of
    grid steps so v7x's two TensorCores each get the same amount of work."""
    if B <= 256:
        return B                            # latency-bound: whole batch, 1 step
    n_steps = max(2, -(-B // _MAX_TILE_B))  # cdiv
    n_steps += n_steps % 2                  # round up to an even step count
    return min(_MAX_TILE_B, _round_up(-(-B // n_steps), _SUBLANE))


def mlp_kernel(x_ref, w1_ref, b1_ref, w2_ref, b2_ref, o_ref):
    # Two MXU matmuls on bf16 operands with f32 accumulation; bias add + ReLU
    # epilogue kept in f32 (v5e has no bf16 VPU).
    x = x_ref[...].astype(w1_ref.dtype)
    h = jnp.dot(x, w1_ref[...], preferred_element_type=jnp.float32) + b1_ref[...]
    h = jnp.maximum(h, 0.0)                                    # ReLU (f32)
    y = jnp.dot(h.astype(w2_ref.dtype), w2_ref[...],
                preferred_element_type=jnp.float32) + b2_ref[...]
    o_ref[...] = y.astype(o_ref.dtype)


def init_params(w1, b1, w2, b2, *, compute_dtype=jnp.bfloat16):
    """One-time weight prep (module init): pad H / C_out up to lane multiples
    and store matmul weights in `compute_dtype`. Per-call path then dispatches
    only the pallas_call."""
    C_in, H = w1.shape
    H2, C_out = w2.shape
    assert H2 == H
    H_p = _round_up(H, _LANE)
    C_out_p = _round_up(C_out, _LANE)
    w1p = jnp.pad(w1, ((0, 0), (0, H_p - H))).astype(compute_dtype)
    b1p = jnp.pad(b1.reshape(1, -1).astype(jnp.float32), ((0, 0), (0, H_p - H)))
    w2p = jnp.pad(w2, ((0, H_p - H), (0, C_out_p - C_out))).astype(compute_dtype)
    b2p = jnp.pad(b2.reshape(1, -1).astype(jnp.float32),
                  ((0, 0), (0, C_out_p - C_out)))
    return {"w1": w1p, "b1": b1p, "w2": w2p, "b2": b2p,
            "dims": (C_in, H, C_out)}


def embedding_predictor(x, params, *, slice_output=True):
    """fc2(relu(fc1(x))) with pre-padded params from init_params()."""
    w1p, b1p, w2p, b2p = params["w1"], params["b1"], params["w2"], params["b2"]
    C_in, H, C_out = params["dims"]
    B, C_in_x = x.shape
    assert C_in_x == C_in, "x feature dim does not match fc1.in_features"
    H_p = w1p.shape[1]
    C_out_p = w2p.shape[1]

    tile_b = _pick_tile_b(B)
    grid = (pl.cdiv(B, tile_b),)            # ragged last tile handled by Pallas

    x_isz = jnp.dtype(x.dtype).itemsize
    w_isz = jnp.dtype(w1p.dtype).itemsize

    # Advisory cost for XLA's scheduler, from the TRUE (unpadded) dims.
    flops = 2 * B * (C_in * H + H * C_out)
    bytes_accessed = (B * C_in * x_isz
                      + (C_in * H + H * C_out) * w_isz
                      + (H + C_out) * 4
                      + B * C_out * x_isz)

    # VMEM budget from actual tile sizes; cap at 48 MiB so it also fits v7x's
    # 64 MiB per-TC VMEM (v5e/v6e have 128 MiB and plenty of headroom).
    vmem_need = (2 * tile_b * C_in * x_isz            # x tile (double-buffered)
                 + 2 * tile_b * C_out_p * x_isz       # out tile (double-buffered)
                 + (C_in * H_p + H_p * C_out_p) * w_isz   # weights, Buffered(1)
                 + (H_p + C_out_p) * 4                # biases
                 + 2 * tile_b * H_p * 4)              # h intermediate
    vmem_limit = int(min(max(4 * vmem_need, 32 << 20), 48 << 20))

    def _resident(shape):
        # Constant index_map => block never changes; single-buffer it.
        return pl.BlockSpec(shape, lambda i: (0, 0),
                            pipeline_mode=pl.Buffered(1))

    out_p = pl.pallas_call(
        mlp_kernel,
        out_shape=jax.ShapeDtypeStruct((B, C_out_p), x.dtype),
        grid_spec=pltpu.PrefetchScalarGridSpec(
            num_scalar_prefetch=0,
            grid=grid,
            in_specs=[
                pl.BlockSpec((tile_b, C_in), lambda i: (i, 0)),  # x, unpadded
                _resident((C_in, H_p)),                          # w1
                _resident((1, H_p)),                             # b1
                _resident((H_p, C_out_p)),                       # w2
                _resident((1, C_out_p)),                         # b2
            ],
            out_specs=pl.BlockSpec((tile_b, C_out_p), lambda i: (i, 0)),
        ),
        compiler_params=pltpu.CompilerParams(
            dimension_semantics=("parallel",),
            vmem_limit_bytes=vmem_limit,
        ),
        cost_estimate=pl.CostEstimate(
            flops=int(flops), transcendentals=0,
            bytes_accessed=int(bytes_accessed)),
    )(x, w1p, b1p, w2p, b2p)

    # Batch dim is exact; only lane padding remains. Skip the slice entirely if
    # the consumer can take the 128-lane layout.
    return out_p[:, :C_out] if slice_output else out_p


def reference(x, w1, b1, w2, b2, *, compute_dtype=jnp.float32):
    cd = compute_dtype
    h = jnp.dot(x.astype(cd), w1.astype(cd),
                preferred_element_type=jnp.float32) + b1.reshape(1, -1)
    h = jnp.maximum(h, 0.0)
    return jnp.dot(h.astype(cd), w2.astype(cd),
                   preferred_element_type=jnp.float32) + b2.reshape(1, -1)


if __name__ == "__main__":
    # Small shapes consistent with the module's forward:
    #   x: (batch, in_channels) -> (batch, out_channels)
    B, C_in, H, C_out = 16, 32, 64, 16

    key = jax.random.PRNGKey(0)
    kx, kw1, kb1, kw2, kb2 = jax.random.split(key, 5)

    x = jax.random.normal(kx, (B, C_in), dtype=jnp.float32)

    # Deterministic init (PyTorch-Linear-like uniform bounds), transposed layout.
    bound1 = 1.0 / (C_in ** 0.5)
    w1 = jax.random.uniform(kw1, (C_in, H), minval=-bound1, maxval=bound1,
                            dtype=jnp.float32)
    b1 = jax.random.uniform(kb1, (H,), minval=-bound1, maxval=bound1,
                            dtype=jnp.float32)
    bound2 = 1.0 / (H ** 0.5)
    w2 = jax.random.uniform(kw2, (H, C_out), minval=-bound2, maxval=bound2,
                            dtype=jnp.float32)
    b2 = jax.random.uniform(kb2, (C_out,), minval=-bound2, maxval=bound2,
                            dtype=jnp.float32)

    # One-time weight prep (pads + bf16 cast happen once, not per call).
    params = init_params(w1, b1, w2, b2, compute_dtype=jnp.bfloat16)

    out = embedding_predictor(x, params)
    out = jax.block_until_ready(out)

    assert out.shape == (B, C_out)
    # Matching-precision reference (bf16 operands, f32 accumulate/epilogue).
    ref_bf16 = reference(x, w1, b1, w2, b2, compute_dtype=jnp.bfloat16)
    assert jnp.allclose(out, ref_bf16, atol=1e-4, rtol=1e-4), "mismatch vs bf16 reference"
    # Sanity vs. pure-f32 reference within bf16 rounding tolerance.
    ref_f32 = reference(x, w1, b1, w2, b2, compute_dtype=jnp.float32)
    assert jnp.allclose(out, ref_f32, atol=5e-2, rtol=5e-2), "mismatch vs f32 reference"

    print("KERNEL_OK")
</pallas_src>

<mosaic_0001>
module attributes {stable_mosaic.version = 11 : i64} {
  func.func @mlp_kernel(%arg0: i32, %arg1: memref<16x32xf32, #tpu.memory_space<vmem>>, %arg2: memref<32x128xbf16, #tpu.memory_space<vmem>>, %arg3: memref<1x128xf32, #tpu.memory_space<vmem>>, %arg4: memref<128x128xbf16, #tpu.memory_space<vmem>>, %arg5: memref<1x128xf32, #tpu.memory_space<vmem>>, %arg6: memref<16x128xf32, #tpu.memory_space<vmem>>) attributes {dimension_semantics = [#tpu.dimension_semantics<parallel>], iteration_bounds = array<i64: 1>, scalar_prefetch = 0 : i64, scratch_operands = 0 : i64, tpu.core_type = #tpu.core_type<tc>, window_params = [{transform_indices = @transform_0, window_bounds = array<i64: 16, 32>}, {pipeline_mode = #tpu.pipeline_mode<synchronous>, transform_indices = @transform_1, window_bounds = array<i64: 32, 128>}, {pipeline_mode = #tpu.pipeline_mode<synchronous>, transform_indices = @transform_2, window_bounds = array<i64: 1, 128>}, {pipeline_mode = #tpu.pipeline_mode<synchronous>, transform_indices = @transform_3, window_bounds = array<i64: 128, 128>}, {pipeline_mode = #tpu.pipeline_mode<synchronous>, transform_indices = @transform_4, window_bounds = array<i64: 1, 128>}, {transform_indices = @transform_5, window_bounds = array<i64: 16, 128>}]} {
    %c0 = arith.constant 0 : index
    %c0_0 = arith.constant 0 : index
    %0 = vector.load %arg1[%c0, %c0_0] : memref<16x32xf32, #tpu.memory_space<vmem>>, vector<16x32xf32>
    %1 = arith.truncf %0 : vector<16x32xf32> to vector<16x32xbf16>
    %c0_1 = arith.constant 0 : index
    %c0_2 = arith.constant 0 : index
    %2 = vector.load %arg2[%c0_1, %c0_2] : memref<32x128xbf16, #tpu.memory_space<vmem>>, vector<32x128xbf16>
    %cst = arith.constant dense<0.000000e+00> : vector<16x128xf32>
    %3 = tpu.matmul %1, %2, %cst {dimension_numbers = #tpu.dot_dimension_numbers<[1], [0], [0], [1], [0, 0, 1, 1], [], []>} : vector<16x32xbf16>, vector<32x128xbf16>, vector<16x128xf32> -> vector<16x128xf32>
    %c0_3 = arith.constant 0 : index
    %c0_4 = arith.constant 0 : index
    %4 = vector.load %arg3[%c0_3, %c0_4] : memref<1x128xf32, #tpu.memory_space<vmem>>, vector<1x128xf32>
    %5 = vector.broadcast %4 : vector<1x128xf32> to vector<16x128xf32>
    %6 = arith.addf %3, %5 : vector<16x128xf32>
    %cst_5 = arith.constant 0.000000e+00 : f32
    %7 = vector.broadcast %cst_5 : f32 to vector<16x128xf32>
    %8 = arith.maximumf %6, %7 : vector<16x128xf32>
    %9 = arith.truncf %8 : vector<16x128xf32> to vector<16x128xbf16>
    %c0_6 = arith.constant 0 : index
    %c0_7 = arith.constant 0 : index
    %10 = vector.load %arg4[%c0_6, %c0_7] : memref<128x128xbf16, #tpu.memory_space<vmem>>, vector<128x128xbf16>
    %cst_8 = arith.constant dense<0.000000e+00> : vector<16x128xf32>
    %11 = tpu.matmul %9, %10, %cst_8 {dimension_numbers = #tpu.dot_dimension_numbers<[1], [0], [0], [1], [0, 0, 1, 1], [], []>} : vector<16x128xbf16>, vector<128x128xbf16>, vector<16x128xf32> -> vector<16x128xf32>
    %c0_9 = arith.constant 0 : index
    %c0_10 = arith.constant 0 : index
    %12 = vector.load %arg5[%c0_9, %c0_10] : memref<1x128xf32, #tpu.memory_space<vmem>>, vector<1x128xf32>
    %13 = vector.broadcast %12 : vector<1x128xf32> to vector<16x128xf32>
    %14 = arith.addf %11, %13 : vector<16x128xf32>
    %c0_11 = arith.constant 0 : index
    %c0_12 = arith.constant 0 : index
    %15 = vector.load %arg6[%c0_11, %c0_12] : memref<16x128xf32, #tpu.memory_space<vmem>>, vector<16x128xf32>
    tpu.vector_store %arg6[%c0_11, %c0_12], %14 {strides = array<i32>} : memref<16x128xf32, #tpu.memory_space<vmem>>, vector<16x128xf32>,
    return
  }
  func.func @transform_0(%arg0: i32) -> (i32, i32) {
    %c0_i32 = arith.constant 0 : i32
    %c0_i32_0 = arith.constant 0 : i32
    return %arg0, %c0_i32 : i32, i32
  }
  func.func @transform_1(%arg0: i32) -> (i32, i32) {
    %c0_i32 = arith.constant 0 : i32
    %c0_i32_0 = arith.constant 0 : i32
    %c0_i32_1 = arith.constant 0 : i32
    return %c0_i32, %c0_i32_0 : i32, i32
  }
  func.func @transform_2(%arg0: i32) -> (i32, i32) {
    %c0_i32 = arith.constant 0 : i32
    %c0_i32_0 = arith.constant 0 : i32
    %c0_i32_1 = arith.constant 0 : i32
    return %c0_i32, %c0_i32_0 : i32, i32
  }
  func.func @transform_3(%arg0: i32) -> (i32, i32) {
    %c0_i32 = arith.constant 0 : i32
    %c0_i32_0 = arith.constant 0 : i32
    %c0_i32_1 = arith.constant 0 : i32
    return %c0_i32, %c0_i32_0 : i32, i32
  }
  func.func @transform_4(%arg0: i32) -> (i32, i32) {
    %c0_i32 = arith.constant 0 : i32
    %c0_i32_0 = arith.constant 0 : i32
    %c0_i32_1 = arith.constant 0 : i32
    return %c0_i32, %c0_i32_0 : i32, i32
  }
  func.func @transform_5(%arg0: i32) -> (i32, i32) {
    %c0_i32 = arith.constant 0 : i32
    %c0_i32_0 = arith.constant 0 : i32
    return %arg0, %c0_i32 : i32, i32
  }
}

</mosaic_0001>

<llo_original>
// kernel: tpu_custom_call.1
$region0: #{tpu_custom_call.1}
  #allocation0 [shape = 'u32[]', space=smem, size = 0x4, offset = 0x4, fixed_abs, tag = 'smem constant byte address 0x4 - core index']
  #allocation1 [shape = 'u32[144,128]{1,0:T(1,128)}', space=vmem, size = 0x12000, scoped, tag = 'internal scratch']
  %s0 = inlined_call_operand.hbm [shape: f32[16,32], index: 0, kind: input, shape index: {}]
  %s1 = inlined_call_operand.hbm [shape: bf16[32,128], index: 1, kind: input, shape index: {}]
  %s2 = inlined_call_operand.vmem [shape: f32[1,128], index: 2, kind: input, shape index: {}]
  %s3 = inlined_call_operand.hbm [shape: bf16[128,128], index: 3, kind: input, shape index: {}]
  %s4 = inlined_call_operand.vmem [shape: f32[1,128], index: 4, kind: input, shape index: {}]
  %s5 = inlined_call_operand.hbm [shape: f32[16,128], index: 5, kind: output, shape index: {}]
  %s6 = sld [smem:[#allocation0]]
  $region42: #{tpu_custom_call.1} parent=0
    _
  %s8 = ssub.s32 1, %s6
  %s9 = scalar_select 0, %s8, %s6
  $region1: #{tpu_custom_call.1} parent=0
    #allocation2 [shape = 'u8[8192]{0}', space=vmem, size = 0x2000, scoped, tag = 'input window, operand 0, single buffered']
    #allocation3 [shape = 's32[1]{0}', space=sflag, size = 0x4, scoped, tag = 'scoped memory for tpu_custom_call.1']
    #allocation4 [shape = 's32[1]{0}', space=sflag, size = 0x4, scoped, tag = 'scoped memory for tpu_custom_call.1']
    #allocation5 [shape = 'u8[8192]{0}', space=vmem, size = 0x2000, scoped, tag = 'input window, operand 1, single buffered']
    #allocation6 [shape = 's32[1]{0}', space=sflag, size = 0x4, scoped, tag = 'scoped memory for tpu_custom_call.1']
    #allocation7 [shape = 'u8[32768]{0}', space=vmem, size = 0x8000, scoped, tag = 'input window, operand 3, single buffered']
    #allocation8 [shape = 'u8[8192]{0}', space=vmem, size = 0x2000, scoped, tag = 'output window, operand 0, single buffered']
    %10 = vsyncpa [#allocation3], 0
    %11 = vsyncpa [#allocation6], 0
    %12 = vsyncpa [#allocation4], 0
    // Predicated region
    $region2: #{tpu_custom_call.1} parent=1 // pred_check
      _
    $region3: #{tpu_custom_call.1} parent=1 // pred_check_branch
      %14 = sbr.rel (0) target = $region5
    $region4: #{tpu_custom_call.1} parent=1 // pred_region
      %s16 = ssub.s32 256, 256
      %17 = vsyncadd [#allocation3], %s16
      %s18 = sshll.u32 [#allocation2], 4
      %s19 = int_to_ptr.vmem [resolvable:$true] %s18
      %24 = dma.hbm_to_vmem [thread:$0]  %s0, 256, %s19, [#allocation3], 128, 128, 8
    $region5: #{tpu_custom_call.1} parent=1 // pred_fallthru
      _
    // Predicated region
    $region6: #{tpu_custom_call.1} parent=1 // pred_check
      _
    $region7: #{tpu_custom_call.1} parent=1 // pred_check_branch
      %26 = sbr.rel (0) target = $region9
    $region8: #{tpu_custom_call.1} parent=1 // pred_region
      %s28 = ssub.s32 256, 256
      %29 = vsyncadd [#allocation6], %s28
      %s30 = sshll.u32 [#allocation5], 4
      %s31 = int_to_ptr.vmem [resolvable:$true] %s30
      %36 = dma.hbm_to_vmem [thread:$0]  %s1, 256, %s31, [#allocation6], 64, 64, 4
    $region9: #{tpu_custom_call.1} parent=1 // pred_fallthru
      _
    // Predicated region
    $region10: #{tpu_custom_call.1} parent=1 // pred_check
      _
    $region11: #{tpu_custom_call.1} parent=1 // pred_check_branch
      %38 = sbr.rel (0) target = $region13
    $region12: #{tpu_custom_call.1} parent=1 // pred_region
      _
    $region13: #{tpu_custom_call.1} parent=1 // pred_fallthru
      _
    // Predicated region
    $region14: #{tpu_custom_call.1} parent=1 // pred_check
      _
    $region15: #{tpu_custom_call.1} parent=1 // pred_check_branch
      %40 = sbr.rel (0) target = $region17
    $region16: #{tpu_custom_call.1} parent=1 // pred_region
      %s42 = ssub.s32 1024, 1024
      %43 = vsyncadd [#allocation6], %s42
      %s44 = sshll.u32 [#allocation7], 4
      %s45 = int_to_ptr.vmem [resolvable:$true] %s44
      %50 = dma.hbm_to_vmem [thread:$0]  %s3, 1024, %s45, [#allocation6], 64, 64, 4
    $region17: #{tpu_custom_call.1} parent=1 // pred_fallthru
      _
    // Predicated region
    $region18: #{tpu_custom_call.1} parent=1 // pred_check
      _
    $region19: #{tpu_custom_call.1} parent=1 // pred_check_branch
      %52 = sbr.rel (0) target = $region21
    $region20: #{tpu_custom_call.1} parent=1 // pred_region
      _
    $region21: #{tpu_custom_call.1} parent=1 // pred_fallthru
      _
    // Predicated region
    $region22: #{tpu_custom_call.1} parent=1 // pred_check
      _
    $region23: #{tpu_custom_call.1} parent=1 // pred_check_branch
      %54 = sbr.rel (0) target = $region25
    $region24: #{tpu_custom_call.1} parent=1 // pred_region
      %55 = dma.done [#allocation3], 256
    $region25: #{tpu_custom_call.1} parent=1 // pred_fallthru
      _
    // Predicated region
    $region26: #{tpu_custom_call.1} parent=1 // pred_check
      _
    $region27: #{tpu_custom_call.1} parent=1 // pred_check_branch
      %57 = sbr.rel (0) target = $region29
    $region28: #{tpu_custom_call.1} parent=1 // pred_region
      %58 = dma.done [#allocation6], 256
    $region29: #{tpu_custom_call.1} parent=1 // pred_fallthru
      _
    // Predicated region
    $region30: #{tpu_custom_call.1} parent=1 // pred_check
      _
    $region31: #{tpu_custom_call.1} parent=1 // pred_check_branch
      %60 = sbr.rel (0) target = $region33
    $region32: #{tpu_custom_call.1} parent=1 // pred_region
      %61 = dma.done [#allocation6], 1024
    $region33: #{tpu_custom_call.1} parent=1 // pred_fallthru
      _
    %v63 = vld [vmem:[#allocation2] sm:$0xff]
    %v64 = vld [vmem:[#allocation2 + $0x8] sm:$0xff]
    %v65 = vpack.c.bf16 %v64, %v63
    %v66 = vld [vmem:[#allocation5] sm:$0xf]
    %v67 = vld [vmem:[#allocation5 + $0x4] sm:$0xf]
    %v68 = vld [vmem:[#allocation5 + $0x8] sm:$0xf]
    %v69 = vld [vmem:[#allocation5 + $0xc] sm:$0xf]
    %v70 = vld [vmem:[%s2] sm:$0x1]
    %v72 = vlaneseq
    %v73 = vshrl.u32 %v72, 7
    %v74 = vsub.s32 0, %v73
    %v75 = vrot.slane %v70, %v74
    %v81 = vunpack.c.l.b16 %v66
    %v82 = vunpack.c.l.b16 %v67
    %v83 = vunpack.c.l.b16 %v68
    %v84 = vunpack.c.l.b16 %v69
    %v85 = vpack.c.b16 %v82, %v81
    %v86 = vpack.c.b16 %v84, %v83
    %vm89 = vcmask 261120
    %v91 = vsel %vm89, %v65, 0
    %93 = vmatprep.subr.bf16.mxu0 0
    %94 = vmatpush1.bf16.msra.mxu0 %v85
    %95 = vmatprep.subr.bf16.mxu0 0
    %96 = vmatpush1.bf16.msra.mxu0 %v86
    %97 = vmatprep.subr.bf16.mxu0 0
    %98 = vmatpush1.bf16.msra.mxu0 0
    %99 = vmatprep.subr.bf16.mxu0 0
    %100 = vmatpush1.bf16.msra.mxu0 0
    %101 = vmatprep.subr.bf16.mxu0 0
    %102 = vmatpush1.bf16.msra.mxu0 0
    %103 = vmatprep.subr.bf16.mxu0 0
    %104 = vmatpush1.bf16.msra.mxu0 0
    %105 = vmatprep.subr.bf16.mxu0 0
    %106 = vmatpush1.bf16.msra.mxu0 0
    %107 = vmatprep.subr.bf16.mxu0 0
    %108 = vmatpush1.bf16.msra.mxu0 0
    %109 = vmatprep.subr.bf16.mxu0 0
    %110 = vmatpush1.bf16.msra.mxu0 0
    %111 = vmatprep.subr.bf16.mxu0 0
    %112 = vmatpush1.bf16.msra.mxu0 0
    %113 = vmatprep.subr.bf16.mxu0 0
    %114 = vmatpush1.bf16.msra.mxu0 0
    %115 = vmatprep.subr.bf16.mxu0 0
    %116 = vmatpush1.bf16.msra.mxu0 0
    %117 = vmatprep.subr.bf16.mxu0 0
    %118 = vmatpush1.bf16.msra.mxu0 0
    %119 = vmatprep.subr.bf16.mxu0 0
    %120 = vmatpush1.bf16.msra.mxu0 0
    %121 = vmatprep.subr.bf16.mxu0 0
    %122 = vmatpush1.bf16.msra.mxu0 0
    %123 = vmatprep.subr.bf16.mxu0 0
    %124 = vmatpush1.bf16.msra.mxu0 0
    %125 = vmatprep.mubr.bf16.mxu0 0
    %126 = vmatmul.mubr.bf16.gmra.mrb[0].mxu0 %v91
    %v127 = vpop.f32.mrb[0].mxu0
    %v128 = vadd.f32 %v75, %v127
    %v129 = vpop.f32.mrb[0].mxu0
    %v130 = vpop.f32.mrb[0].mxu0
    %v131 = vadd.f32 %v75, %v130
    %v132 = vpop.f32.mrb[0].mxu0
    %133 = vdwg.mxu0
    %v134 = vmax.f32 %v128, 0.0
    %v135 = vmax.f32 %v131, 0.0
    %v136 = vpack.c.bf16 %v135, %v134
    %v137 = vld [vmem:[#allocation7] sm:$0xf]
    %v138 = vld [vmem:[#allocation7 + $0x4] sm:$0xf]
    %v139 = vld [vmem:[#allocation7 + $0x8] sm:$0xf]
    %v140 = vld [vmem:[#allocation7 + $0xc] sm:$0xf]
    %v141 = vld [vmem:[#allocation7 + $0x10] sm:$0xf]
    %v142 = vld [vmem:[#allocation7 + $0x14] sm:$0xf]
    %v143 = vld [vmem:[#allocation7 + $0x18] sm:$0xf]
    %v144 = vld [vmem:[#allocation7 + $0x1c] sm:$0xf]
    %v145 = vld [vmem:[#allocation7 + $0x20] sm:$0xf]
    %v146 = vld [vmem:[#allocation7 + $0x24] sm:$0xf]
    %v147 = vld [vmem:[#allocation7 + $0x28] sm:$0xf]
    %v148 = vld [vmem:[#allocation7 + $0x2c] sm:$0xf]
    %v149 = vld [vmem:[#allocation7 + $0x30] sm:$0xf]
    %v150 = vld [vmem:[#allocation7 + $0x34] sm:$0xf]
    %v151 = vld [vmem:[#allocation7 + $0x38] sm:$0xf]
    %v152 = vld [vmem:[#allocation7 + $0x3c] sm:$0xf]
    %v153 = vld [vmem:[%s4] sm:$0x1]
    %v155 = vlaneseq
    %v156 = vshrl.u32 %v155, 7
    %v157 = vsub.s32 0, %v156
    %v158 = vrot.slane %v153, %v157
    %v176 = vunpack.c.l.b16 %v137
    %v177 = vunpack.c.l.b16 %v138
    %v178 = vunpack.c.l.b16 %v139
    %v179 = vunpack.c.l.b16 %v140
    %v180 = vunpack.c.l.b16 %v141
    %v181 = vunpack.c.l.b16 %v142
    %v182 = vunpack.c.l.b16 %v143
    %v183 = vunpack.c.l.b16 %v144
    %v184 = vunpack.c.l.b16 %v145
    %v185 = vunpack.c.l.b16 %v146
    %v186 = vunpack.c.l.b16 %v147
    %v187 = vunpack.c.l.b16 %v148
    %v188 = vunpack.c.l.b16 %v149
    %v189 = vunpack.c.l.b16 %v150
    %v190 = vunpack.c.l.b16 %v151
    %v191 = vunpack.c.l.b16 %v152
    %v192 = vpack.c.b16 %v177, %v176
    %v193 = vpack.c.b16 %v179, %v178
    %v194 = vpack.c.b16 %v181, %v180
    %v195 = vpack.c.b16 %v183, %v182
    %v196 = vpack.c.b16 %v185, %v184
    %v197 = vpack.c.b16 %v187, %v186
    %v198 = vpack.c.b16 %v189, %v188
    %v199 = vpack.c.b16 %v191, %v190
    %208 = vmatprep.subr.bf16.mxu0 0
    %209 = vmatpush1.bf16.msra.mxu0 %v192
    %210 = vmatprep.subr.bf16.mxu0 0
    %211 = vmatpush1.bf16.msra.mxu0 %v193
    %212 = vmatprep.subr.bf16.mxu0 0
    %213 = vmatpush1.bf16.msra.mxu0 %v194
    %214 = vmatprep.subr.bf16.mxu0 0
    %215 = vmatpush1.bf16.msra.mxu0 %v195
    %216 = vmatprep.subr.bf16.mxu0 0
    %217 = vmatpush1.bf16.msra.mxu0 %v196
    %218 = vmatprep.subr.bf16.mxu0 0
    %219 = vmatpush1.bf16.msra.mxu0 %v197
    %220 = vmatprep.subr.bf16.mxu0 0
    %221 = vmatpush1.bf16.msra.mxu0 %v198
    %222 = vmatprep.subr.bf16.mxu0 0
    %223 = vmatpush1.bf16.msra.mxu0 %v199
    %224 = vmatprep.subr.bf16.mxu0 0
    %225 = vmatpush1.bf16.msra.mxu0 0
    %226 = vmatprep.subr.bf16.mxu0 0
    %227 = vmatpush1.bf16.msra.mxu0 0
    %228 = vmatprep.subr.bf16.mxu0 0
    %229 = vmatpush1.bf16.msra.mxu0 0
    %230 = vmatprep.subr.bf16.mxu0 0
    %231 = vmatpush1.bf16.msra.mxu0 0
    %232 = vmatprep.subr.bf16.mxu0 0
    %233 = vmatpush1.bf16.msra.mxu0 0
    %234 = vmatprep.subr.bf16.mxu0 0
    %235 = vmatpush1.bf16.msra.mxu0 0
    %236 = vmatprep.subr.bf16.mxu0 0
    %237 = vmatpush1.bf16.msra.mxu0 0
    %238 = vmatprep.subr.bf16.mxu0 0
    %239 = vmatpush1.bf16.msra.mxu0 0
    %240 = vmatprep.mubr.bf16.mxu0 0
    %241 = vmatmul.mubr.bf16.gmra.mrb[0].mxu0 %v136
    %v242 = vpop.f32.mrb[0].mxu0
    %v243 = vadd.f32 %v158, %v242
    %v244 = vpop.f32.mrb[0].mxu0
    %v245 = vpop.f32.mrb[0].mxu0
    %v246 = vadd.f32 %v158, %v245
    %v247 = vpop.f32.mrb[0].mxu0
    %248 = vdwg.mxu0
    %249 = vst [vmem:[#allocation8] sm:$0xff] %v243
    %250 = vst [vmem:[#allocation8 + $0x8] sm:$0xff] %v246
    // Predicated region
    $region34: #{tpu_custom_call.1} parent=1 // pred_check
      _
    $region35: #{tpu_custom_call.1} parent=1 // pred_check_branch
      %252 = sbr.rel (0) target = $region37
    $region36: #{tpu_custom_call.1} parent=1 // pred_region
      %s254 = ssub.s32 256, 256
      %255 = vsyncadd [#allocation4], %s254
      %s256 = sshll.u32 [#allocation8], 4
      %s257 = int_to_ptr.vmem [resolvable:$true] %s256
      %262 = dma.vmem_to_hbm [thread:$0]  %s257, 256, %s5, [#allocation4], 128, 128, 8
    $region37: #{tpu_custom_call.1} parent=1 // pred_fallthru
      _
    // Predicated region
    $region38: #{tpu_custom_call.1} parent=1 // pred_check
      _
    $region39: #{tpu_custom_call.1} parent=1 // pred_check_branch
      %264 = sbr.rel (0) target = $region41
    $region40: #{tpu_custom_call.1} parent=1 // pred_region
      %265 = dma.done [#allocation4], 256
    $region41: #{tpu_custom_call.1} parent=1 // pred_fallthru
      _
    %266 = vsyncpa [#allocation3], 1
    %267 = vsyncpa [#allocation6], 1
    %268 = vsyncpa [#allocation4], 1

</llo_original>
